<compile_context>
chip_gen: v5e
topology: v5e:2x2
jax: 0.10.0
libtpu: 0.0.40
codegen_flags: <defaults>
</compile_context>

<pallas_src>
import functools

import jax
import jax.numpy as jnp
from jax import lax
from jax.experimental import pallas as pl
from jax.experimental.pallas import tpu as pltpu


# ---------------------------------------------------------------------------
# Kernel
# ---------------------------------------------------------------------------
def _make_kernel(n_layers, bias_offsets, bias_sizes):
    """Builds the fused kernel for `n_layers` masked-linear + activation layers.

    Ref order: x_ref, w1..wL (pre-masked, (out,in)), b_ref ((sum_out,1)), o_ref.
    Activations/compute are in the transposed layout (features, batch_tile):
    batch on the 128-lane axis -> lane-dense VPU/EUP work and output stores.
    """
    _NT = (((1,), (1,)), ((), ()))   # contract last dim of both (rhs transposed)
    _NN = (((1,), (0,)), ((), ()))   # standard matmul

    def _sigmoid(h):                 # 1 EUP push per vreg (vs exp + add + divide)
        return 0.5 * jnp.tanh(0.5 * h) + 0.5

    def _relu(h):
        return jnp.maximum(h, 0.0)

    def kernel(*refs):
        x_ref = refs[0]
        w_refs = refs[1:1 + n_layers]
        b_ref = refs[1 + n_layers]
        o_ref = refs[2 + n_layers]

        # rhs starts as the natural-layout x tile (bm, D0); the first dot
        # contracts its last dim (NT), producing h in transposed layout.
        rhs = x_ref[...]
        h = None
        for i in range(n_layers):
            dn = _NT if i == 0 else _NN
            h = lax.dot_general(w_refs[i][...], rhs, dn,
                                preferred_element_type=jnp.float32)
            h = h + b_ref[pl.ds(bias_offsets[i], bias_sizes[i]), :]
            h = _sigmoid(h) if (i == 0 or i == n_layers - 1) else _relu(h)
            if i + 1 < n_layers:
                nxt = w_refs[i + 1].dtype
                rhs = h if h.dtype == nxt else h.astype(nxt)  # no-op in f32 mode

        o_ref[...] = h.astype(o_ref.dtype)                    # (D_out, bm), lane-dense

    return kernel


# ---------------------------------------------------------------------------
# Wrapper
# ---------------------------------------------------------------------------
def prepare_params(params, compute_dtype=jnp.float32):
    """Hoisted, run-once parameter prep: fold mask into weight, transpose to
    (out, in), cast matmul operands, concatenate biases into one operand."""
    wts, biases = [], []
    for (w, m, b) in params:
        wts.append(jnp.asarray(w * m, jnp.float32).T.astype(compute_dtype))
        biases.append(jnp.asarray(b, jnp.float32).reshape(-1, 1))
    return tuple(wts), jnp.concatenate(biases, axis=0)


def _ceil_div(a, b):
    return -(-a // b)


def _choose_batch_tile(B, bm, max_bm):
    """Pick a lane-dense batch tile (multiple of 128) and the padded batch."""
    n_chunks = _ceil_div(B, 128)                      # 128-lane chunks covering B
    if bm is None:
        max_chunks = max(1, max_bm // 128)
        n_steps = max(1, _ceil_div(n_chunks, max_chunks))
        if n_steps < 2 and n_chunks >= 2:             # keep >=2 steps for v7x's 2 TCs
            n_steps = 2
        bm = _ceil_div(n_chunks, n_steps) * 128
    else:
        bm = max(128, _ceil_div(bm, 128) * 128)
    n_steps = _ceil_div(B, bm)
    return bm, n_steps, n_steps * bm


def custom_autoencoder_forward(x, params=None, *, prepared=None, bm=None,
                               max_bm=1024, compute_dtype=jnp.float32,
                               out_dtype=jnp.float32, transposed_output=False):
    """Forward pass of the masked-linear autoencoder.

    x:        (B, D0)
    params:   [(W_i, mask_i, b_i)] with W_i/mask_i (in, out), b_i (1, out)
    prepared: optional output of prepare_params() (skips per-call param prep)
    Returns (B, D_out) (or the lane-dense (D_out, B) layout if transposed_output).
    """
    if prepared is None:
        prepared = prepare_params(params, compute_dtype)
    wts, b_all = prepared
    n_layers = len(wts)
    B, d0 = x.shape
    assert wts[0].shape[1] == d0, "x feature dim does not match first layer"
    d_out = wts[-1].shape[0]

    bm, n_steps, b_pad = _choose_batch_tile(B, bm, max_bm)

    xc = x if x.dtype == wts[0].dtype else x.astype(wts[0].dtype)
    if b_pad != B:                                    # pad -> unmasked lane-dense tiles
        xc = jnp.pad(xc, ((0, b_pad - B), (0, 0)))

    # x tiled over the batch (natural layout); weights / bias are grid-invariant
    # full blocks (constant index_map -> stay VMEM-resident across steps).
    in_specs = [pl.BlockSpec((bm, d0), lambda i: (i, 0))]
    for w in wts:
        in_specs.append(pl.BlockSpec(w.shape, lambda i: (0, 0)))
    in_specs.append(pl.BlockSpec(b_all.shape, lambda i: (0, 0)))
    out_specs = pl.BlockSpec((d_out, bm), lambda i: (0, i))

    out_dims = [w.shape[0] for w in wts]
    offs = [0]
    for d in out_dims[:-1]:
        offs.append(offs[-1] + d)
    kernel = _make_kernel(n_layers, tuple(offs), tuple(out_dims))

    out_t = pl.pallas_call(
        kernel,
        out_shape=jax.ShapeDtypeStruct((d_out, b_pad), out_dtype),
        grid_spec=pltpu.PrefetchScalarGridSpec(
            num_scalar_prefetch=0,
            grid=(n_steps,),
            in_specs=in_specs,
            out_specs=out_specs,
        ),
        compiler_params=pltpu.CompilerParams(
            dimension_semantics=("parallel",)),
    )(xc, *wts, b_all)

    if b_pad != B:
        out_t = out_t[:, :B]
    if transposed_output:                              # lane-dense layout for consumers
        return out_t
    return out_t.T                                     # (B, D_out) module contract


# ---------------------------------------------------------------------------
# Reference / init (for the self-test)
# ---------------------------------------------------------------------------
def _make_params(key, layer_dims, selection_prob):
    """Init mirroring the torch module's construction.
    # TODO(synk): masks/weights use JAX PRNG, so bitwise parity with torch's RNG
    # stream is not reproduced (only the masked-linear semantics are)."""
    params = []
    for i in range(1, len(layer_dims)):
        d_in, d_out = layer_dims[i - 1], layer_dims[i]
        key, km, kw, kb = jax.random.split(key, 4)
        mask = (jax.random.uniform(km, (d_in, d_out)) < selection_prob
                ).astype(jnp.float32)
        bound = 1.0 / jnp.sqrt(jnp.float32(d_in))
        w = jax.random.uniform(kw, (d_in, d_out), jnp.float32, -bound, bound)
        b = jax.random.uniform(kb, (1, d_out), jnp.float32, -bound, bound)
        params.append((w, mask, b))
    return params


def _reference_forward(x, params):
    """Pure-JAX reference of the torch forward pass."""
    n = len(params)
    h = x
    for i, (w, m, b) in enumerate(params):
        h = h @ (w * m) + b
        h = jax.nn.sigmoid(h) if (i == 0 or i == n - 1) else jnp.maximum(h, 0.0)
    return h


if __name__ == "__main__":
    # layer_dims = [16, 32, 8, 32, 16] -> encoder [16,32,8], decoder [8,32,16]
    layer_dims = [16, 32, 8, 32, 16]
    selection_prob = 0.66

    key = jax.random.PRNGKey(0)
    key, kx1, kx2 = jax.random.split(key, 3)
    params = _make_params(key, layer_dims, selection_prob)
    prep = prepare_params(params)                      # hoisted param prep (run once)

    fwd = jax.jit(functools.partial(custom_autoencoder_forward, prepared=prep))

    # Case 1: batch divisible by 128 -> bm=128, grid=(2,) (both v7x TCs busy).
    x1 = jax.random.normal(kx1, (256, layer_dims[0]), jnp.float32)
    out1 = jax.block_until_ready(fwd(x1))
    ref1 = _reference_forward(x1, params)
    assert out1.shape == (256, layer_dims[-1])
    assert jnp.allclose(out1, ref1, atol=2e-5, rtol=2e-5), "mismatch vs reference (B=256)"

    # Case 2: ragged batch -> zero-padded to the 128-lane tile, sliced after.
    x2 = jax.random.normal(kx2, (200, layer_dims[0]), jnp.float32)
    out2 = jax.block_until_ready(
        jax.jit(functools.partial(custom_autoencoder_forward, prepared=prep))(x2))
    ref2 = _reference_forward(x2, params)
    assert out2.shape == (200, layer_dims[-1])
    assert jnp.allclose(out2, ref2, atol=2e-5, rtol=2e-5), "mismatch vs reference (B=200)"

    print("KERNEL_OK")
</pallas_src>

<mosaic_0001>
module attributes {stable_mosaic.version = 11 : i64} {
  func.func @kernel(%arg0: i32, %arg1: memref<128x16xf32, #tpu.memory_space<vmem>>, %arg2: memref<32x16xf32, #tpu.memory_space<vmem>>, %arg3: memref<8x32xf32, #tpu.memory_space<vmem>>, %arg4: memref<32x8xf32, #tpu.memory_space<vmem>>, %arg5: memref<16x32xf32, #tpu.memory_space<vmem>>, %arg6: memref<88x1xf32, #tpu.memory_space<vmem>>, %arg7: memref<16x128xf32, #tpu.memory_space<vmem>>) attributes {dimension_semantics = [#tpu.dimension_semantics<parallel>], iteration_bounds = array<i64: 2>, scalar_prefetch = 0 : i64, scratch_operands = 0 : i64, tpu.core_type = #tpu.core_type<tc>, window_params = [{transform_indices = @transform_0, window_bounds = array<i64: 128, 16>}, {pipeline_mode = #tpu.pipeline_mode<synchronous>, transform_indices = @transform_1, window_bounds = array<i64: 32, 16>}, {pipeline_mode = #tpu.pipeline_mode<synchronous>, transform_indices = @transform_2, window_bounds = array<i64: 8, 32>}, {pipeline_mode = #tpu.pipeline_mode<synchronous>, transform_indices = @transform_3, window_bounds = array<i64: 32, 8>}, {pipeline_mode = #tpu.pipeline_mode<synchronous>, transform_indices = @transform_4, window_bounds = array<i64: 16, 32>}, {pipeline_mode = #tpu.pipeline_mode<synchronous>, transform_indices = @transform_5, window_bounds = array<i64: 88, 1>}, {transform_indices = @transform_6, window_bounds = array<i64: 16, 128>}]} {
    %c0 = arith.constant 0 : index
    %c0_0 = arith.constant 0 : index
    %0 = vector.load %arg1[%c0, %c0_0] : memref<128x16xf32, #tpu.memory_space<vmem>>, vector<128x16xf32>
    %c0_1 = arith.constant 0 : index
    %c0_2 = arith.constant 0 : index
    %1 = vector.load %arg2[%c0_1, %c0_2] : memref<32x16xf32, #tpu.memory_space<vmem>>, vector<32x16xf32>
    %cst = arith.constant dense<0.000000e+00> : vector<32x128xf32>
    %2 = tpu.matmul %1, %0, %cst {dimension_numbers = #tpu.dot_dimension_numbers<[1], [1], [0], [0], [0, 0, 1, 0], [], []>} : vector<32x16xf32>, vector<128x16xf32>, vector<32x128xf32> -> vector<32x128xf32>
    %c0_3 = arith.constant 0 : index
    %c0_4 = arith.constant 0 : index
    %3 = vector.load %arg6[%c0_3, %c0_4] : memref<88x1xf32, #tpu.memory_space<vmem>>, vector<32x1xf32>
    %4 = vector.broadcast %3 : vector<32x1xf32> to vector<32x128xf32>
    %5 = arith.addf %2, %4 : vector<32x128xf32>
    %cst_5 = arith.constant 5.000000e-01 : f32
    %6 = vector.broadcast %cst_5 : f32 to vector<32x128xf32>
    %7 = arith.mulf %6, %5 : vector<32x128xf32>
    %8 = math.tanh %7 : vector<32x128xf32>
    %cst_6 = arith.constant 5.000000e-01 : f32
    %9 = vector.broadcast %cst_6 : f32 to vector<32x128xf32>
    %10 = arith.mulf %9, %8 : vector<32x128xf32>
    %cst_7 = arith.constant 5.000000e-01 : f32
    %11 = vector.broadcast %cst_7 : f32 to vector<32x128xf32>
    %12 = arith.addf %10, %11 : vector<32x128xf32>
    %c0_8 = arith.constant 0 : index
    %c0_9 = arith.constant 0 : index
    %13 = vector.load %arg3[%c0_8, %c0_9] : memref<8x32xf32, #tpu.memory_space<vmem>>, vector<8x32xf32>
    %cst_10 = arith.constant dense<0.000000e+00> : vector<8x128xf32>
    %14 = tpu.matmul %13, %12, %cst_10 {dimension_numbers = #tpu.dot_dimension_numbers<[1], [0], [0], [1], [0, 0, 1, 1], [], []>} : vector<8x32xf32>, vector<32x128xf32>, vector<8x128xf32> -> vector<8x128xf32>
    %c32 = arith.constant 32 : index
    %c0_11 = arith.constant 0 : index
    %15 = vector.load %arg6[%c32, %c0_11] : memref<88x1xf32, #tpu.memory_space<vmem>>, vector<8x1xf32>
    %16 = vector.broadcast %15 : vector<8x1xf32> to vector<8x128xf32>
    %17 = arith.addf %14, %16 : vector<8x128xf32>
    %cst_12 = arith.constant 0.000000e+00 : f32
    %18 = vector.broadcast %cst_12 : f32 to vector<8x128xf32>
    %19 = arith.maximumf %17, %18 : vector<8x128xf32>
    %c0_13 = arith.constant 0 : index
    %c0_14 = arith.constant 0 : index
    %20 = vector.load %arg4[%c0_13, %c0_14] : memref<32x8xf32, #tpu.memory_space<vmem>>, vector<32x8xf32>
    %cst_15 = arith.constant dense<0.000000e+00> : vector<32x128xf32>
    %21 = tpu.matmul %20, %19, %cst_15 {dimension_numbers = #tpu.dot_dimension_numbers<[1], [0], [0], [1], [0, 0, 1, 1], [], []>} : vector<32x8xf32>, vector<8x128xf32>, vector<32x128xf32> -> vector<32x128xf32>
    %c40 = arith.constant 40 : index
    %c0_16 = arith.constant 0 : index
    %22 = vector.load %arg6[%c40, %c0_16] : memref<88x1xf32, #tpu.memory_space<vmem>>, vector<32x1xf32>
    %23 = vector.broadcast %22 : vector<32x1xf32> to vector<32x128xf32>
    %24 = arith.addf %21, %23 : vector<32x128xf32>
    %cst_17 = arith.constant 0.000000e+00 : f32
    %25 = vector.broadcast %cst_17 : f32 to vector<32x128xf32>
    %26 = arith.maximumf %24, %25 : vector<32x128xf32>
    %c0_18 = arith.constant 0 : index
    %c0_19 = arith.constant 0 : index
    %27 = vector.load %arg5[%c0_18, %c0_19] : memref<16x32xf32, #tpu.memory_space<vmem>>, vector<16x32xf32>
    %cst_20 = arith.constant dense<0.000000e+00> : vector<16x128xf32>
    %28 = tpu.matmul %27, %26, %cst_20 {dimension_numbers = #tpu.dot_dimension_numbers<[1], [0], [0], [1], [0, 0, 1, 1], [], []>} : vector<16x32xf32>, vector<32x128xf32>, vector<16x128xf32> -> vector<16x128xf32>
    %c72 = arith.constant 72 : index
    %c0_21 = arith.constant 0 : index
    %29 = vector.load %arg6[%c72, %c0_21] : memref<88x1xf32, #tpu.memory_space<vmem>>, vector<16x1xf32>
    %30 = vector.broadcast %29 : vector<16x1xf32> to vector<16x128xf32>
    %31 = arith.addf %28, %30 : vector<16x128xf32>
    %cst_22 = arith.constant 5.000000e-01 : f32
    %32 = vector.broadcast %cst_22 : f32 to vector<16x128xf32>
    %33 = arith.mulf %32, %31 : vector<16x128xf32>
    %34 = math.tanh %33 : vector<16x128xf32>
    %cst_23 = arith.constant 5.000000e-01 : f32
    %35 = vector.broadcast %cst_23 : f32 to vector<16x128xf32>
    %36 = arith.mulf %35, %34 : vector<16x128xf32>
    %cst_24 = arith.constant 5.000000e-01 : f32
    %37 = vector.broadcast %cst_24 : f32 to vector<16x128xf32>
    %38 = arith.addf %36, %37 : vector<16x128xf32>
    %c0_25 = arith.constant 0 : index
    %c0_26 = arith.constant 0 : index
    %39 = vector.load %arg7[%c0_25, %c0_26] : memref<16x128xf32, #tpu.memory_space<vmem>>, vector<16x128xf32>
    tpu.vector_store %arg7[%c0_25, %c0_26], %38 {strides = array<i32>} : memref<16x128xf32, #tpu.memory_space<vmem>>, vector<16x128xf32>,
    return
  }
  func.func @transform_0(%arg0: i32) -> (i32, i32) {
    %c0_i32 = arith.constant 0 : i32
    %c0_i32_0 = arith.constant 0 : i32
    return %arg0, %c0_i32 : i32, i32
  }
  func.func @transform_1(%arg0: i32) -> (i32, i32) {
    %c0_i32 = arith.constant 0 : i32
    %c0_i32_0 = arith.constant 0 : i32
    %c0_i32_1 = arith.constant 0 : i32
    return %c0_i32, %c0_i32_0 : i32, i32
  }
  func.func @transform_2(%arg0: i32) -> (i32, i32) {
    %c0_i32 = arith.constant 0 : i32
    %c0_i32_0 = arith.constant 0 : i32
    %c0_i32_1 = arith.constant 0 : i32
    return %c0_i32, %c0_i32_0 : i32, i32
  }
  func.func @transform_3(%arg0: i32) -> (i32, i32) {
    %c0_i32 = arith.constant 0 : i32
    %c0_i32_0 = arith.constant 0 : i32
    %c0_i32_1 = arith.constant 0 : i32
    return %c0_i32, %c0_i32_0 : i32, i32
  }
  func.func @transform_4(%arg0: i32) -> (i32, i32) {
    %c0_i32 = arith.constant 0 : i32
    %c0_i32_0 = arith.constant 0 : i32
    %c0_i32_1 = arith.constant 0 : i32
    return %c0_i32, %c0_i32_0 : i32, i32
  }
  func.func @transform_5(%arg0: i32) -> (i32, i32) {
    %c0_i32 = arith.constant 0 : i32
    %c0_i32_0 = arith.constant 0 : i32
    %c0_i32_1 = arith.constant 0 : i32
    return %c0_i32, %c0_i32_0 : i32, i32
  }
  func.func @transform_6(%arg0: i32) -> (i32, i32) {
    %c0_i32 = arith.constant 0 : i32
    %c0_i32_0 = arith.constant 0 : i32
    return %c0_i32, %arg0 : i32, i32
  }
}

</mosaic_0001>

<llo_original>
// kernel: custom_autoencoder_forward.1
$region0: #{custom_autoencoder_forward.1}
  #allocation0 [shape = 'u32[]', space=smem, size = 0x4, offset = 0x4, fixed_abs, tag = 'smem constant byte address 0x4 - core index']
  #allocation1 [shape = 'u32[72,128]{1,0:T(1,128)}', space=vmem, size = 0x9000, scoped, tag = 'internal scratch']
  %s0 = inlined_call_operand.vmem [shape: f32[256,16], index: 0, kind: input, shape index: {}]
  %s1 = inlined_call_operand.vmem [shape: f32[32,16], index: 1, kind: input, shape index: {}]
  %s2 = inlined_call_operand.vmem [shape: f32[8,32], index: 2, kind: input, shape index: {}]
  %s3 = inlined_call_operand.vmem [shape: f32[32,8], index: 3, kind: input, shape index: {}]
  %s4 = inlined_call_operand.vmem [shape: f32[16,32], index: 4, kind: input, shape index: {}]
  %s5 = inlined_call_operand.vmem [shape: f32[88,1], index: 5, kind: input, shape index: {}]
  %s6 = inlined_call_operand.hbm [shape: f32[16,256], index: 6, kind: output, shape index: {}]
  %s7 = sld [smem:[#allocation0]]
  $region57: #{custom_autoencoder_forward.1} parent=0
    _
  %s9 = ssub.s32 1, %s7
  %s10 = scalar_select 0, %s9, %s7
  $region1: #{custom_autoencoder_forward.1} parent=0
    #allocation2 [shape = 'u8[16384]{0}', space=vmem, size = 0x4000, scoped, tag = 'output window, operand 0']
    #allocation3 [shape = 's32[2]{0}', space=sflag, size = 0x8, scoped, tag = 'scoped memory for custom_autoencoder_forward.1']
    %11 = vsyncpa [#allocation3], 0
    %s12 = scalar_lea.sflag [#allocation3], 1
    %13 = vsyncpa %s12, 0
    loop: start=0, step=1, limit=4
    $region2: #{custom_autoencoder_forward.1} parent=1 // loop_pre_header
      _
    $region3: #{custom_autoencoder_forward.1} parent=1 // loop_header
      %s15 = sphi 0, %s19
      %p16 = scmp.ge.s32.totalorder %s15, 4
      %s25 = sphi 0, %s27
      %s28 = sphi 0, %s25
      %s29 = sphi 0, %s28
      %s45 = sphi 0, %s29
      %s49 = sphi 0, %s49
      %s51 = sphi 0, %s49
      %s52 = sphi 0, %s51
      %s66 = sphi 0, %s52
      %s70 = sphi 0, %s70
      %s72 = sphi 0, %s70
      %s73 = sphi 0, %s72
      %s87 = sphi 0, %s73
      %s91 = sphi 0, %s91
      %s93 = sphi 0, %s91
      %s94 = sphi 0, %s93
      %s108 = sphi 0, %s94
      %s112 = sphi 0, %s112
      %s114 = sphi 0, %s112
      %s115 = sphi 0, %s114
      %s129 = sphi 0, %s115
      %s133 = sphi 0, %s133
      %s135 = sphi 0, %s133
      %s136 = sphi 0, %s135
      %s150 = sphi 0, %s136
      %s156 = sphi 0, %s158
      %s159 = sphi 0, %s156
      %s160 = sphi 0, %s159
      %s176 = sphi 0, %s160
    $region4: #{custom_autoencoder_forward.1} parent=1 // loop_header_branch
      %18 = sbr.rel (%p16) target = $region8
    $region5: #{custom_autoencoder_forward.1} parent=1 // loop_body
      %s20 = ssub.s32 %s15, 1
      %s21 = ssub.s32 %s15, 2
      %s22 = sadd.s32 %s15, 1
      %s23 = ssub.s32 %s15, %s22
      %p24 = scmp.eq.s32.totalorder %s23, 0
      %s26 = sadd.s32 %s25, 1
      %s27 = scalar_select %p24, %s25, %s26
      %p30 = pneg %p24
      %p31 = scmp.eq.s32.totalorder %s15, 1
      %p32 = por %p30, %p31
      %p33 = scmp.ne.s32.totalorder %s25, %s28
      %p34 = scmp.eq.s32.totalorder %s15, 0
      %p35 = por %p33, %p34
      %p36 = scmp.ne.s32.totalorder %s25, %s28
      %p37 = scmp.eq.s32.totalorder %s20, 1
      %p38 = por %p36, %p37
      %p39 = scmp.ne.s32.totalorder %s28, %s29
      %p40 = scmp.eq.s32.totalorder %s20, 0
      %p41 = por %p39, %p40
      %p42 = scmp.ne.s32.totalorder %s28, %s29
      %p43 = scmp.eq.s32.totalorder %s21, 1
      %p44 = por %p42, %p43
      %p46 = scmp.ne.s32.totalorder %s29, %s45
      %p47 = scmp.eq.s32.totalorder %s21, 0
      %p48 = por %p46, %p47
      %s50 = sadd.s32 %s49, 1
      %p53 = scmp.eq.s32.totalorder %s15, 1
      %p54 = scmp.ne.s32.totalorder %s49, %s51
      %p55 = scmp.eq.s32.totalorder %s15, 0
      %p56 = por %p54, %p55
      %p57 = scmp.ne.s32.totalorder %s49, %s51
      %p58 = scmp.eq.s32.totalorder %s20, 1
      %p59 = por %p57, %p58
      %p60 = scmp.ne.s32.totalorder %s51, %s52
      %p61 = scmp.eq.s32.totalorder %s20, 0
      %p62 = por %p60, %p61
      %p63 = scmp.ne.s32.totalorder %s51, %s52
      %p64 = scmp.eq.s32.totalorder %s21, 1
      %p65 = por %p63, %p64
      %p67 = scmp.ne.s32.totalorder %s52, %s66
      %p68 = scmp.eq.s32.totalorder %s21, 0
      %p69 = por %p67, %p68
      %s71 = sadd.s32 %s70, 1
      %p74 = scmp.eq.s32.totalorder %s15, 1
      %p75 = scmp.ne.s32.totalorder %s70, %s72
      %p76 = scmp.eq.s32.totalorder %s15, 0
      %p77 = por %p75, %p76
      %p78 = scmp.ne.s32.totalorder %s70, %s72
      %p79 = scmp.eq.s32.totalorder %s20, 1
      %p80 = por %p78, %p79
      %p81 = scmp.ne.s32.totalorder %s72, %s73
      %p82 = scmp.eq.s32.totalorder %s20, 0
      %p83 = por %p81, %p82
      %p84 = scmp.ne.s32.totalorder %s72, %s73
      %p85 = scmp.eq.s32.totalorder %s21, 1
      %p86 = por %p84, %p85
      %p88 = scmp.ne.s32.totalorder %s73, %s87
      %p89 = scmp.eq.s32.totalorder %s21, 0
      %p90 = por %p88, %p89
      %s92 = sadd.s32 %s91, 1
      %p95 = scmp.eq.s32.totalorder %s15, 1
      %p96 = scmp.ne.s32.totalorder %s91, %s93
      %p97 = scmp.eq.s32.totalorder %s15, 0
      %p98 = por %p96, %p97
      %p99 = scmp.ne.s32.totalorder %s91, %s93
      %p100 = scmp.eq.s32.totalorder %s20, 1
      %p101 = por %p99, %p100
      %p102 = scmp.ne.s32.totalorder %s93, %s94
      %p103 = scmp.eq.s32.totalorder %s20, 0
      %p104 = por %p102, %p103
      %p105 = scmp.ne.s32.totalorder %s93, %s94
      %p106 = scmp.eq.s32.totalorder %s21, 1
      %p107 = por %p105, %p106
      %p109 = scmp.ne.s32.totalorder %s94, %s108
      %p110 = scmp.eq.s32.totalorder %s21, 0
      %p111 = por %p109, %p110
      %s113 = sadd.s32 %s112, 1
      %p116 = scmp.eq.s32.totalorder %s15, 1
      %p117 = scmp.ne.s32.totalorder %s112, %s114
      %p118 = scmp.eq.s32.totalorder %s15, 0
      %p119 = por %p117, %p118
      %p120 = scmp.ne.s32.totalorder %s112, %s114
      %p121 = scmp.eq.s32.totalorder %s20, 1
      %p122 = por %p120, %p121
      %p123 = scmp.ne.s32.totalorder %s114, %s115
      %p124 = scmp.eq.s32.totalorder %s20, 0
      %p125 = por %p123, %p124
      %p126 = scmp.ne.s32.totalorder %s114, %s115
      %p127 = scmp.eq.s32.totalorder %s21, 1
      %p128 = por %p126, %p127
      %p130 = scmp.ne.s32.totalorder %s115, %s129
      %p131 = scmp.eq.s32.totalorder %s21, 0
      %p132 = por %p130, %p131
      %s134 = sadd.s32 %s133, 1
      %p137 = scmp.eq.s32.totalorder %s15, 1
      %p138 = scmp.ne.s32.totalorder %s133, %s135
      %p139 = scmp.eq.s32.totalorder %s15, 0
      %p140 = por %p138, %p139
      %p141 = scmp.ne.s32.totalorder %s133, %s135
      %p142 = scmp.eq.s32.totalorder %s20, 1
      %p143 = por %p141, %p142
      %p144 = scmp.ne.s32.totalorder %s135, %s136
      %p145 = scmp.eq.s32.totalorder %s20, 0
      %p146 = por %p144, %p145
      %p147 = scmp.ne.s32.totalorder %s135, %s136
      %p148 = scmp.eq.s32.totalorder %s21, 1
      %p149 = por %p147, %p148
      %p151 = scmp.ne.s32.totalorder %s136, %s150
      %p152 = scmp.eq.s32.totalorder %s21, 0
      %p153 = por %p151, %p152
      %s154 = ssub.s32 %s15, %s22
      %p155 = scmp.eq.s32.totalorder %s154, 0
      %s157 = sadd.s32 %s156, 1
      %s158 = scalar_select %p155, %s156, %s157
      %p161 = pneg %p155
      %p162 = scmp.eq.s32.totalorder %s15, 1
      %p163 = por %p161, %p162
      %p164 = scmp.ne.s32.totalorder %s156, %s159
      %p165 = scmp.eq.s32.totalorder %s15, 0
      %p166 = por %p164, %p165
      %p167 = scmp.ne.s32.totalorder %s156, %s159
      %p168 = scmp.eq.s32.totalorder %s20, 1
      %p169 = por %p167, %p168
      %p170 = scmp.ne.s32.totalorder %s159, %s160
      %p171 = scmp.eq.s32.totalorder %s20, 0
      %p172 = por %p170, %p171
      %p173 = scmp.ne.s32.totalorder %s159, %s160
      %p174 = scmp.eq.s32.totalorder %s21, 1
      %p175 = por %p173, %p174
      %p177 = scmp.ne.s32.totalorder %s160, %s176
      %p178 = scmp.eq.s32.totalorder %s21, 0
      %p179 = por %p177, %p178
      %p180 = scmp.le.s32.totalorder 1, %s15
      %p181 = scmp.lt.s32.totalorder %s15, 3
      %p182 = pnand %p180, %p181
      %p183 = pneg %p182
      // Predicated region
      $region9: #{custom_autoencoder_forward.1} parent=5 // pred_check
        _
      $region10: #{custom_autoencoder_forward.1} parent=5 // pred_check_branch
        %185 = sbr.rel (%p182) target = $region12
      $region11: #{custom_autoencoder_forward.1} parent=5 // pred_region
        %s186 = ssub.s32 %s15, 1
        // Predicated region
        $region13: #{custom_autoencoder_forward.1} parent=11 // pred_check
          %p187 = pneg %p62
        $region14: #{custom_autoencoder_forward.1} parent=11 // pred_check_branch
          %189 = sbr.rel (%p187) target = $region16
        $region15: #{custom_autoencoder_forward.1} parent=11 // pred_region
          _
        $region16: #{custom_autoencoder_forward.1} parent=11 // pred_fallthru
          _
        // Predicated region
        $region17: #{custom_autoencoder_forward.1} parent=11 // pred_check
          %p190 = pneg %p83
        $region18: #{custom_autoencoder_forward.1} parent=11 // pred_check_branch
          %192 = sbr.rel (%p190) target = $region20
        $region19: #{custom_autoencoder_forward.1} parent=11 // pred_region
          _
        $region20: #{custom_autoencoder_forward.1} parent=11 // pred_fallthru
          _
        // Predicated region
        $region21: #{custom_autoencoder_forward.1} parent=11 // pred_check
          %p193 = pneg %p104
        $region22: #{custom_autoencoder_forward.1} parent=11 // pred_check_branch
          %195 = sbr.rel (%p193) target = $region24
        $region23: #{custom_autoencoder_forward.1} parent=11 // pred_region
          _
        $region24: #{custom_autoencoder_forward.1} parent=11 // pred_fallthru
          _
        // Predicated region
        $region25: #{custom_autoencoder_forward.1} parent=11 // pred_check
          %p196 = pneg %p125
        $region26: #{custom_autoencoder_forward.1} parent=11 // pred_check_branch
          %198 = sbr.rel (%p196) target = $region28
        $region27: #{custom_autoencoder_forward.1} parent=11 // pred_region
          _
        $region28: #{custom_autoencoder_forward.1} parent=11 // pred_fallthru
          _
        // Predicated region
        $region29: #{custom_autoencoder_forward.1} parent=11 // pred_check
          %p199 = pneg %p146
        $region30: #{custom_autoencoder_forward.1} parent=11 // pred_check_branch
          %201 = sbr.rel (%p199) target = $region32
        $region31: #{custom_autoencoder_forward.1} parent=11 // pred_region
          _
        $region32: #{custom_autoencoder_forward.1} parent=11 // pred_fallthru
          _
      $region12: #{custom_autoencoder_forward.1} parent=5 // pred_fallthru
        _
      %p202 = scmp.lt.s32.totalorder %s15, 2
      // Predicated region
      $region33: #{custom_autoencoder_forward.1} parent=5 // pred_check
        %p203 = pneg %p202
      $region34: #{custom_autoencoder_forward.1} parent=5 // pred_check_branch
        %205 = sbr.rel (%p203) target = $region36
      $region35: #{custom_autoencoder_forward.1} parent=5 // pred_region
        // Predicated region
        $region37: #{custom_autoencoder_forward.1} parent=35 // pred_check
          %p206 = pneg %p35
        $region38: #{custom_autoencoder_forward.1} parent=35 // pred_check_branch
          %208 = sbr.rel (%p206) target = $region40
        $region39: #{custom_autoencoder_forward.1} parent=35 // pred_region
          %s209 = smul.u32 16, %s15
          %p210 = scmp.lt.s32.totalorder %s209, 31
          %s211 = scalar_select %p210, %s209, 31
          %s212 = smul.addr %s211, 8
          %s213 = scalar_lea.vmem %s0, %s212
          %s214 = smul.u32 16, %s15
        $region40: #{custom_autoencoder_forward.1} parent=35 // pred_fallthru
          _
      $region36: #{custom_autoencoder_forward.1} parent=5 // pred_fallthru
        _
      %p215 = scmp.le.s32.totalorder 1, %s15
      %p216 = scmp.lt.s32.totalorder %s15, 3
      %p217 = pnand %p215, %p216
      %p218 = pneg %p217
      // Predicated region
      $region41: #{custom_autoencoder_forward.1} parent=5 // pred_check
        _
      $region42: #{custom_autoencoder_forward.1} parent=5 // pred_check_branch
        %220 = sbr.rel (%p217) target = $region44
      $region43: #{custom_autoencoder_forward.1} parent=5 // pred_region
        %s221 = ssub.s32 %s15, 1
        %s222 = smul.u32 16, %s20
        %p223 = scmp.lt.s32.totalorder %s222, 31
        %s224 = scalar_select %p223, %s222, 31
        %s225 = smul.addr %s224, 8
        %s226 = scalar_lea.vmem %s0, %s225
        %p227 = pneg %p41
        %p228 = pneg %p38
        %p229 = pneg %p62
        %p230 = pneg %p59
        %p231 = pneg %p83
        %p232 = pneg %p80
        %p233 = pneg %p104
        %p234 = pneg %p101
        %p235 = pneg %p125
        %p236 = pneg %p122
        %p237 = pneg %p146
        %p238 = pneg %p143
        %p239 = pneg %p172
        %p240 = pneg %p169
        %s241 = sand.u32 %s159, 1
        %s242 = scalar_lea.sflag [#allocation3], %s241
        %s243 = sand.u32 %s159, 1
        %s244 = smul.addr %s243, 16
        %s245 = scalar_lea.vmem [#allocation2], %s244
        %s246 = smul.u32 16, %s20
        %p247 = scmp.lt.s32.totalorder %s246, 31
        %s248 = scalar_select %p247, %s246, 31
        %s249 = smul.addr %s248, 8
        %s250 = scalar_lea.vmem %s0, %s249
        %s251 = smul.u32 16, %s20
        %v252 = vld [vmem:[%s250] sm:$0xff]
        %v253 = vld [vmem:[%s250 + $0x8] sm:$0xff]
        %v254 = vld [vmem:[%s250 + $0x10] sm:$0xff]
        %v255 = vld [vmem:[%s250 + $0x18] sm:$0xff]
        %v256 = vld [vmem:[%s250 + $0x20] sm:$0xff]
        %v257 = vld [vmem:[%s250 + $0x28] sm:$0xff]
        %v258 = vld [vmem:[%s250 + $0x30] sm:$0xff]
        %v259 = vld [vmem:[%s250 + $0x38] sm:$0xff]
        %v260 = vld [vmem:[%s250 + $0x40] sm:$0xff]
        %v261 = vld [vmem:[%s250 + $0x48] sm:$0xff]
        %v262 = vld [vmem:[%s250 + $0x50] sm:$0xff]
        %v263 = vld [vmem:[%s250 + $0x58] sm:$0xff]
        %v264 = vld [vmem:[%s250 + $0x60] sm:$0xff]
        %v265 = vld [vmem:[%s250 + $0x68] sm:$0xff]
        %v266 = vld [vmem:[%s250 + $0x70] sm:$0xff]
        %v267 = vld [vmem:[%s250 + $0x78] sm:$0xff]
        %v268 = vld [vmem:[%s1] sm:$0xff]
        %v269 = vld [vmem:[%s1 + $0x8] sm:$0xff]
        %v270 = vld [vmem:[%s1 + $0x10] sm:$0xff]
        %v271 = vld [vmem:[%s1 + $0x18] sm:$0xff]
        %v272 = vld [vmem:[%s5] sm:$0xff]
        %v273 = vld [vmem:[%s5 + $0x8] sm:$0xff]
        %v274 = vld [vmem:[%s5 + $0x10] sm:$0xff]
        %v275 = vld [vmem:[%s5 + $0x18] sm:$0xff]
        %277 = vset.pattern.permute.xlu0 0
        %278 = vperm.xlu0 %277, %v272
        %v279 = vpop.permute.xlu0 %278
        %282 = vset.pattern.permute.xlu0 0
        %283 = vperm.xlu0 %282, %v273
        %v284 = vpop.permute.xlu0 %283
        %287 = vset.pattern.permute.xlu0 0
        %288 = vperm.xlu0 %287, %v274
        %v289 = vpop.permute.xlu0 %288
        %292 = vset.pattern.permute.xlu0 0
        %293 = vperm.xlu0 %292, %v275
        %v294 = vpop.permute.xlu0 %293
        %vm296 = vcmask 130048
        %v298 = vsel %vm296, %v268, 0
        %v301 = vsel %vm296, %v269, 0
        %v304 = vsel %vm296, %v270, 0
        %v307 = vsel %vm296, %v271, 0
        %v310 = vsel %vm296, %v252, 0
        %v313 = vsel %vm296, %v253, 0
        %v316 = vsel %vm296, %v254, 0
        %v319 = vsel %vm296, %v255, 0
        %v322 = vsel %vm296, %v256, 0
        %v325 = vsel %vm296, %v257, 0
        %v328 = vsel %vm296, %v258, 0
        %v331 = vsel %vm296, %v259, 0
        %v334 = vsel %vm296, %v260, 0
        %v337 = vsel %vm296, %v261, 0
        %v340 = vsel %vm296, %v262, 0
        %v343 = vsel %vm296, %v263, 0
        %v346 = vsel %vm296, %v264, 0
        %v349 = vsel %vm296, %v265, 0
        %v352 = vsel %vm296, %v266, 0
        %v355 = vsel %vm296, %v267, 0
        %357 = vmatpush.xpose.msra.mxu0 %v355
        %358 = vmatpush.xpose.msra.mxu0 %v352
        %359 = vmatpush.xpose.msra.mxu0 %v349
        %360 = vmatpush.xpose.msra.mxu0 %v346
        %361 = vmatpush.xpose.msra.mxu0 %v343
        %362 = vmatpush.xpose.msra.mxu0 %v340
        %363 = vmatpush.xpose.msra.mxu0 %v337
        %364 = vmatpush.xpose.msra.mxu0 %v334
        %365 = vmatpush.xpose.msra.mxu0 %v331
        %366 = vmatpush.xpose.msra.mxu0 %v328
        %367 = vmatpush.xpose.msra.mxu0 %v325
        %368 = vmatpush.xpose.msra.mxu0 %v322
        %369 = vmatpush.xpose.msra.mxu0 %v319
        %370 = vmatpush.xpose.msra.mxu0 %v316
        %371 = vmatpush.xpose.msra.mxu0 %v313
        %372 = vmatpush.xpose.msra.mxu0 %v310
        %373 = vmatmul.f32.gmra.mxu0 %v298
        %v374 = vpop.f32.mrf.mxu0
        %v375 = vadd.f32 %v279, %v374
        %376 = vmatmul.f32.gmra.mxu0 %v301
        %v377 = vpop.f32.mrf.mxu0
        %v378 = vadd.f32 %v284, %v377
        %379 = vmatmul.f32.gmra.mxu0 %v304
        %v380 = vpop.f32.mrf.mxu0
        %v381 = vadd.f32 %v289, %v380
        %382 = vmatmul.f32.gmra.mxu0 %v307
        %v383 = vpop.f32.mrf.mxu0
        %v384 = vadd.f32 %v294, %v383
        %385 = vdwg.mxu0
        %v386 = vmul.f32 %v375, 0.5
        %v387 = vmul.f32 %v378, 0.5
        %v388 = vmul.f32 %v381, 0.5
        %v389 = vmul.f32 %v384, 0.5
        %v390 = vtanh.pop %v386
        %v391 = vtanh.pop %v387
        %v392 = vtanh.pop %v388
        %v393 = vtanh.pop %v389
        %v394 = vmul.f32 %v390, 0.5
        %v395 = vmul.f32 %v391, 0.5
        %v396 = vmul.f32 %v392, 0.5
        %v397 = vmul.f32 %v393, 0.5
        %v398 = vadd.f32 %v394, 0.5
        %v399 = vadd.f32 %v395, 0.5
        %v400 = vadd.f32 %v396, 0.5
        %v401 = vadd.f32 %v397, 0.5
        %v402 = vld [vmem:[%s2] sm:$0xff]
        %v403 = vld [vmem:[%s5 + $0x20] sm:$0xff]
        %405 = vset.pattern.permute.xlu0 0
        %406 = vperm.xlu0 %405, %v403
        %v407 = vpop.permute.xlu0 %406
        %vm409 = vcmask 261120
        %v411 = vsel %vm409, %v402, 0
        %413 = vmatpush.msra.mxu0 0.0
        %414 = vmatpush.msra.mxu0 0.0
        %415 = vmatpush.msra.mxu0 0.0
        %416 = vmatpush.msra.mxu0 0.0
        %417 = vmatpush.msra.mxu0 0.0
        %418 = vmatpush.msra.mxu0 0.0
        %419 = vmatpush.msra.mxu0 0.0
        %420 = vmatpush.msra.mxu0 0.0
        %421 = vmatpush.msra.mxu0 0.0
        %422 = vmatpush.msra.mxu0 0.0
        %423 = vmatpush.msra.mxu0 0.0
        %424 = vmatpush.msra.mxu0 0.0
        %425 = vmatpush.msra.mxu0 %v401
        %426 = vmatpush.msra.mxu0 %v400
        %427 = vmatpush.msra.mxu0 %v399
        %428 = vmatpush.msra.mxu0 %v398
        %429 = vmatmul.f32.gmra.mxu0 %v411
        %v430 = vpop.f32.mrf.mxu0
        %v431 = vadd.f32 %v407, %v430
        %432 = vdwg.mxu0
        %v433 = vmax.f32 %v431, 0.0
        %v434 = vld [vmem:[%s3] sm:$0xff]
        %v435 = vld [vmem:[%s3 + $0x8] sm:$0xff]
        %v436 = vld [vmem:[%s3 + $0x10] sm:$0xff]
        %v437 = vld [vmem:[%s3 + $0x18] sm:$0xff]
        %v438 = vld [vmem:[%s5 + $0x28] sm:$0xff]
        %v439 = vld [vmem:[%s5 + $0x30] sm:$0xff]
        %v440 = vld [vmem:[%s5 + $0x38] sm:$0xff]
        %v441 = vld [vmem:[%s5 + $0x40] sm:$0xff]
        %443 = vset.pattern.permute.xlu0 0
        %444 = vperm.xlu0 %443, %v438
        %v445 = vpop.permute.xlu0 %444
        %448 = vset.pattern.permute.xlu0 0
        %449 = vperm.xlu0 %448, %v439
        %v450 = vpop.permute.xlu0 %449
        %453 = vset.pattern.permute.xlu0 0
        %454 = vperm.xlu0 %453, %v440
        %v455 = vpop.permute.xlu0 %454
        %458 = vset.pattern.permute.xlu0 0
        %459 = vperm.xlu0 %458, %v441
        %v460 = vpop.permute.xlu0 %459
        %vm462 = vcmask 64512
        %v464 = vsel %vm462, %v434, 0
        %v467 = vsel %vm462, %v435, 0
        %v470 = vsel %vm462, %v436, 0
        %v473 = vsel %vm462, %v437, 0
        %475 = vmatpush.msra.mxu0 0.0
        %476 = vmatpush.msra.mxu0 0.0
        %477 = vmatpush.msra.mxu0 0.0
        %478 = vmatpush.msra.mxu0 0.0
        %479 = vmatpush.msra.mxu0 0.0
        %480 = vmatpush.msra.mxu0 0.0
        %481 = vmatpush.msra.mxu0 0.0
        %482 = vmatpush.msra.mxu0 0.0
        %483 = vmatpush.msra.mxu0 0.0
        %484 = vmatpush.msra.mxu0 0.0
        %485 = vmatpush.msra.mxu0 0.0
        %486 = vmatpush.msra.mxu0 0.0
        %487 = vmatpush.msra.mxu0 0.0
        %488 = vmatpush.msra.mxu0 0.0
        %489 = vmatpush.msra.mxu0 0.0
        %490 = vmatpush.msra.mxu0 %v433
        %491 = vmatmul.f32.gmra.mxu0 %v464
        %v492 = vpop.f32.mrf.mxu0
        %v493 = vadd.f32 %v445, %v492
        %494 = vmatmul.f32.gmra.mxu0 %v467
        %v495 = vpop.f32.mrf.mxu0
        %v496 = vadd.f32 %v450, %v495
        %497 = vmatmul.f32.gmra.mxu0 %v470
        %v498 = vpop.f32.mrf.mxu0
        %v499 = vadd.f32 %v455, %v498
        %500 = vmatmul.f32.gmra.mxu0 %v473
        %v501 = vpop.f32.mrf.mxu0
        %v502 = vadd.f32 %v460, %v501
        %503 = vdwg.mxu0
        %v504 = vmax.f32 %v493, 0.0
        %v505 = vmax.f32 %v496, 0.0
        %v506 = vmax.f32 %v499, 0.0
        %v507 = vmax.f32 %v502, 0.0
        %v508 = vld [vmem:[%s4] sm:$0xff]
        %v509 = vld [vmem:[%s4 + $0x8] sm:$0xff]
        %v510 = vld [vmem:[%s5 + $0x48] sm:$0xff]
        %v511 = vld [vmem:[%s5 + $0x50] sm:$0xff]
        %513 = vset.pattern.permute.xlu0 0
        %514 = vperm.xlu0 %513, %v510
        %v515 = vpop.permute.xlu0 %514
        %518 = vset.pattern.permute.xlu0 0
        %519 = vperm.xlu0 %518, %v511
        %v520 = vpop.permute.xlu0 %519
        %v523 = vsel %vm409, %v508, 0
        %v526 = vsel %vm409, %v509, 0
        %528 = vmatpush.msra.mxu0 0.0
        %529 = vmatpush.msra.mxu0 0.0
        %530 = vmatpush.msra.mxu0 0.0
        %531 = vmatpush.msra.mxu0 0.0
        %532 = vmatpush.msra.mxu0 0.0
        %533 = vmatpush.msra.mxu0 0.0
        %534 = vmatpush.msra.mxu0 0.0
        %535 = vmatpush.msra.mxu0 0.0
        %536 = vmatpush.msra.mxu0 0.0
        %537 = vmatpush.msra.mxu0 0.0
        %538 = vmatpush.msra.mxu0 0.0
        %539 = vmatpush.msra.mxu0 0.0
        %540 = vmatpush.msra.mxu0 %v507
        %541 = vmatpush.msra.mxu0 %v506
        %542 = vmatpush.msra.mxu0 %v505
        %543 = vmatpush.msra.mxu0 %v504
        %544 = vmatmul.f32.gmra.mxu0 %v523
        %v545 = vpop.f32.mrf.mxu0
        %v546 = vadd.f32 %v515, %v545
        %547 = vmatmul.f32.gmra.mxu0 %v526
        %v548 = vpop.f32.mrf.mxu0
        %v549 = vadd.f32 %v520, %v548
        %550 = vdwg.mxu0
        %v551 = vmul.f32 %v546, 0.5
        %v552 = vmul.f32 %v549, 0.5
        %v553 = vtanh.pop %v551
        %v554 = vtanh.pop %v552
        %v555 = vmul.f32 %v553, 0.5
        %v556 = vmul.f32 %v554, 0.5
        %v557 = vadd.f32 %v555, 0.5
        %v558 = vadd.f32 %v556, 0.5
        %559 = vst [vmem:[%s245] sm:$0xff] %v557
        %560 = vst [vmem:[%s245 + $0x8] sm:$0xff] %v558
        %s561 = sand.u32 %s159, 1
        %s562 = scalar_lea.sflag [#allocation3], %s561
        %s563 = sand.u32 %s159, 1
        %s564 = smul.addr %s563, 16
        %s565 = scalar_lea.vmem [#allocation2], %s564
        // Predicated region
        $region45: #{custom_autoencoder_forward.1} parent=43 // pred_check
          %p566 = pneg %p169
        $region46: #{custom_autoencoder_forward.1} parent=43 // pred_check_branch
          %568 = sbr.rel (%p566) target = $region48
        $region47: #{custom_autoencoder_forward.1} parent=43 // pred_region
          %570 = vsyncadd %s562, 0
          %s571 = smul.addr %s20, 8
          %s572 = scalar_lea.hbm %s6, %s571
          %s573 = sshll.u32 %s565, 4
          %s574 = int_to_ptr.vmem [resolvable:$true] %s573
          %s575 = sshll.u32 %s572, 4
          %s576 = int_to_ptr.hbm [resolvable:$true] %s575
          %581 = dma.vmem_to_hbm [thread:$0]  %s574, 256, %s576, %s562, 128, 256, 8
        $region48: #{custom_autoencoder_forward.1} parent=43 // pred_fallthru
          _
      $region44: #{custom_autoencoder_forward.1} parent=5 // pred_fallthru
        _
      %p582 = scmp.le.s32.totalorder 2, %s15
      // Predicated region
      $region49: #{custom_autoencoder_forward.1} parent=5 // pred_check
        %p583 = pneg %p582
      $region50: #{custom_autoencoder_forward.1} parent=5 // pred_check_branch
        %585 = sbr.rel (%p583) target = $region52
      $region51: #{custom_autoencoder_forward.1} parent=5 // pred_region
        %s586 = ssub.s32 %s15, 2
        // Predicated region
        $region53: #{custom_autoencoder_forward.1} parent=51 // pred_check
          %p587 = pneg %p175
        $region54: #{custom_autoencoder_forward.1} parent=51 // pred_check_branch
          %589 = sbr.rel (%p587) target = $region56
        $region55: #{custom_autoencoder_forward.1} parent=51 // pred_region
          %s590 = sand.u32 %s160, 1
          %s591 = scalar_lea.sflag [#allocation3], %s590
          %s592 = sand.u32 %s160, 1
          %s593 = smul.addr %s592, 16
          %s594 = scalar_lea.vmem [#allocation2], %s593
          %596 = dma.done %s591, 256
        $region56: #{custom_autoencoder_forward.1} parent=51 // pred_fallthru
          _
      $region52: #{custom_autoencoder_forward.1} parent=5 // pred_fallthru
        _
    $region6: #{custom_autoencoder_forward.1} parent=1 // loop_footer
      %s19 = sadd.s32 1, %s15
    $region7: #{custom_autoencoder_forward.1} parent=1 // loop_footer_branch
      %14 = sbr.rel target = $region3
    $region8: #{custom_autoencoder_forward.1} parent=1 // loop_exit
      _
    %597 = vsyncpa [#allocation3], 1
    %s598 = scalar_lea.sflag [#allocation3], 1
    %599 = vsyncpa %s598, 1

</llo_original>
